<compile_context>
chip_gen: v5e
topology: v5e:2x2
jax: 0.10.0
libtpu: 0.0.40
codegen_flags: <defaults>
</compile_context>

<pallas_src>
import jax
import jax.numpy as jnp
from jax.experimental import pallas as pl
from jax.experimental.pallas import tpu as pltpu

_LANE_WIDTH = 1024   # lane-dense width (multiple of 128 -> unmasked vst)
_TILE_ROWS = 512     # (512, 1024) f32 output block = 2 MiB (v5e-safe)
_VMEM_BUDGET = 8 << 20  # ~8 MiB of live double-buffered blocks


def _to_f32_kernel(x_ref, o_ref):
    # Single fused pass: dtype cast (if any) + lane-dense copy of the real part.
    o_ref[...] = x_ref[...].astype(jnp.float32)


def _sublane_multiple(dtype) -> int:
    # Native sublane packing: 8 rows for 4-byte, 16 for 2-byte, 32 for 1-byte.
    return max(8, 32 // jnp.dtype(dtype).itemsize)


def _pick_tile_rows(rows: int, width: int, in_itemsize: int, sublane: int) -> int:
    if rows <= sublane:
        return rows  # full-extent row block (always legal)
    # Keep >= 2 grid steps so both v7x TensorCores get work, round up to the
    # sublane multiple, and never exceed the 2 MiB-block default.
    half = -(-rows // 2)
    half = -(-half // sublane) * sublane
    tile = min(_TILE_ROWS, half)
    # VMEM cap: double-buffered input + f32 output blocks must fit the budget
    # (only triggers for very wide ragged shapes; the lane-dense path never hits it).
    bytes_per_row = width * (in_itemsize + 4) * 2
    cap = (_VMEM_BUDGET // max(bytes_per_row, 1)) // sublane * sublane
    return max(sublane, min(tile, cap))


@jax.jit
def _int2complex_pallas(x):
    """Pallas path: in-kernel cast + real copy, then one fused complex pack."""
    orig_shape = x.shape
    n = x.size

    if n % _LANE_WIDTH == 0:
        # Free reshape to a lane-dense (rows, 1024) view: full-width unmasked stores.
        x2d = x.reshape(n // _LANE_WIDTH, _LANE_WIDTH)
    else:
        # Ragged element count: use the natural (leading, last-dim) view instead of
        # padding — jnp.pad would add a full HBM read+write pass that cannot fuse
        # across the pallas_call boundary.  Pallas masks the partial final row block.
        x2d = x.reshape(-1, orig_shape[-1])
    rows, width = x2d.shape

    sublane = _sublane_multiple(x.dtype)
    tile_rows = _pick_tile_rows(rows, width, jnp.dtype(x.dtype).itemsize, sublane)
    grid = (pl.cdiv(rows, tile_rows),)

    re = pl.pallas_call(
        _to_f32_kernel,
        out_shape=jax.ShapeDtypeStruct((rows, width), jnp.float32),
        grid=grid,
        in_specs=[pl.BlockSpec((tile_rows, width), lambda i: (i, 0))],
        out_specs=pl.BlockSpec((tile_rows, width), lambda i: (i, 0)),
        compiler_params=pltpu.CompilerParams(
            dimension_semantics=("parallel",)),
    )(x2d)

    # The imaginary part is a broadcast zero fused by XLA into the complex pack:
    # it reads the kernel output once and writes the complex64 result once.
    out = jax.lax.complex(re, jnp.zeros_like(re))
    return out.reshape(orig_shape)


@jax.jit
def _int2complex_xla(x):
    """Fused XLA path: the minimum-traffic implementation (default)."""
    xf = x.astype(jnp.float32)
    return jax.lax.complex(xf, jnp.zeros_like(xf))


def incoherent_int2complex(input_field: jax.Array, *, use_pallas: bool = False) -> jax.Array:
    """Equivalent of Incoherent_Int2Complex.forward.

    Default dispatch uses the single fused XLA op (minimum HBM traffic, per
    review). `use_pallas=True` runs the optimized Pallas path instead.
    """
    if not use_pallas or input_field.ndim == 0 or input_field.size == 0:
        return _int2complex_xla(input_field)
    return _int2complex_pallas(input_field)


if __name__ == "__main__":
    key = jax.random.PRNGKey(0)

    # Small NCHW optical-field tensor; 2*4*16*16 = 2048 elements -> lane-dense path.
    x = jax.random.normal(key, (2, 4, 16, 16), dtype=jnp.float32)

    y = incoherent_int2complex(x, use_pallas=True)
    jax.block_until_ready(y)
    assert y.dtype == jnp.complex64
    assert y.shape == x.shape
    assert jnp.allclose(jnp.real(y), x)
    assert jnp.allclose(jnp.imag(y), 0.0)

    # Default dispatch (fused XLA, minimum-traffic path) must agree exactly.
    y_ref = incoherent_int2complex(x)
    jax.block_until_ready(y_ref)
    assert jnp.array_equal(y, y_ref)

    # Ragged element count (945, not a multiple of 1024) exercises the
    # no-pad natural-2D path with a masked partial final row block.
    x2 = jax.random.normal(jax.random.PRNGKey(0), (3, 5, 7, 9), dtype=jnp.float32)
    y2 = incoherent_int2complex(x2, use_pallas=True)
    jax.block_until_ready(y2)
    assert y2.shape == x2.shape and y2.dtype == jnp.complex64
    assert jnp.allclose(jnp.real(y2), x2)
    assert jnp.allclose(jnp.imag(y2), 0.0)

    # bf16 input exercises the in-kernel dtype cast (no separate f32 intermediate).
    x3 = jax.random.normal(jax.random.PRNGKey(1), (2, 4, 16, 16), dtype=jnp.bfloat16)
    y3 = incoherent_int2complex(x3, use_pallas=True)
    jax.block_until_ready(y3)
    assert y3.dtype == jnp.complex64 and y3.shape == x3.shape
    assert jnp.allclose(jnp.real(y3), x3.astype(jnp.float32))
    assert jnp.allclose(jnp.imag(y3), 0.0)

    print("KERNEL_OK")
</pallas_src>

<mosaic_0001>
module attributes {stable_mosaic.version = 11 : i64} {
  func.func @_to_f32_kernel(%arg0: i32, %arg1: memref<2x1024xf32, #tpu.memory_space<vmem>>, %arg2: memref<2x1024xf32, #tpu.memory_space<vmem>>) attributes {dimension_semantics = [#tpu.dimension_semantics<parallel>], iteration_bounds = array<i64: 1>, scalar_prefetch = 0 : i64, scratch_operands = 0 : i64, tpu.core_type = #tpu.core_type<tc>, window_params = [{transform_indices = @transform_0, window_bounds = array<i64: 2, 1024>}, {transform_indices = @transform_1, window_bounds = array<i64: 2, 1024>}]} {
    %c0 = arith.constant 0 : index
    %c0_0 = arith.constant 0 : index
    %0 = vector.load %arg1[%c0, %c0_0] : memref<2x1024xf32, #tpu.memory_space<vmem>>, vector<2x1024xf32>
    %c0_1 = arith.constant 0 : index
    %c0_2 = arith.constant 0 : index
    %1 = vector.load %arg2[%c0_1, %c0_2] : memref<2x1024xf32, #tpu.memory_space<vmem>>, vector<2x1024xf32>
    tpu.vector_store %arg2[%c0_1, %c0_2], %0 {strides = array<i32>} : memref<2x1024xf32, #tpu.memory_space<vmem>>, vector<2x1024xf32>,
    return
  }
  func.func @transform_0(%arg0: i32) -> (i32, i32) {
    %c0_i32 = arith.constant 0 : i32
    %c0_i32_0 = arith.constant 0 : i32
    return %arg0, %c0_i32 : i32, i32
  }
  func.func @transform_1(%arg0: i32) -> (i32, i32) {
    %c0_i32 = arith.constant 0 : i32
    %c0_i32_0 = arith.constant 0 : i32
    return %arg0, %c0_i32 : i32, i32
  }
}

</mosaic_0001>

<llo_original>
// kernel: custom-call
$region0: #{custom-call}
  %s0 = inlined_call_operand.vmem [shape: f32[2,4,16,16], index: 0, kind: input, shape index: {}]
  %s1 = inlined_call_operand.vmem [shape: f32[2,4,16,16], index: 1, kind: input, shape index: {}]
  %s2 = inlined_call_operand.hbm [shape: c64[2,4,16,16], index: 2, kind: output, shape index: {}]
  %s3 = scalar_lea.hbm %s2, 128
  $region1: #{custom-call} parent=0
    #allocation0 [shape = 's32[1]{0}', space=sflag, size = 0x4, scoped, tag = 'scoped memory for custom-call']
    %4 = vsyncpa [#allocation0], 0
    %s6 = sshll.u32 %s0, 4
    %s7 = int_to_ptr.vmem [resolvable:$true] %s6
    %s8 = sshll.u32 %s2, 4
    %s9 = int_to_ptr.hbm [resolvable:$true] %s8
    %11 = dma.vmem_to_hbm [thread:$0]  %s7, 2048, %s9, [#allocation0]
    %13 = dma.done [#allocation0], 2048
    %14 = vsyncpa [#allocation0], 1
  $region2: #{custom-call} parent=0
    #allocation1 [shape = 's32[1]{0}', space=sflag, size = 0x4, scoped, tag = 'scoped memory for custom-call']
    %15 = vsyncpa [#allocation1], 0
    %s17 = sshll.u32 %s1, 4
    %s18 = int_to_ptr.vmem [resolvable:$true] %s17
    %s19 = sshll.u32 %s3, 4
    %s20 = int_to_ptr.hbm [resolvable:$true] %s19
    %22 = dma.vmem_to_hbm [thread:$0]  %s18, 2048, %s20, [#allocation1]
    %24 = dma.done [#allocation1], 2048
    %25 = vsyncpa [#allocation1], 1

// kernel: _int2complex_pallas.1
$region0: #{_int2complex_pallas.1}
  #allocation0 [shape = 'u32[]', space=smem, size = 0x4, offset = 0x4, fixed_abs, tag = 'smem constant byte address 0x4 - core index']
  #allocation1 [shape = 'u32[72,128]{1,0:T(1,128)}', space=vmem, size = 0x9000, scoped, tag = 'internal scratch']
  %s0 = inlined_call_operand.vmem [shape: f32[2,1024], index: 0, kind: input, shape index: {}]
  %s1 = inlined_call_operand.vmem [shape: f32[2,1024], index: 1, kind: output, shape index: {}]
  %s2 = sld [smem:[#allocation0]]
  $region14: #{_int2complex_pallas.1} parent=0
    _
  %s4 = ssub.s32 1, %s2
  %s5 = scalar_select 0, %s4, %s2
  // Predicated region
  $region2: #{_int2complex_pallas.1} parent=0 // pred_check
    _
  $region3: #{_int2complex_pallas.1} parent=0 // pred_check_branch
    %7 = sbr.rel (0) target = $region5
  $region4: #{_int2complex_pallas.1} parent=0 // pred_region
    _
  $region5: #{_int2complex_pallas.1} parent=0 // pred_fallthru
    _
  %v8 = vld [vmem:[%s0] sm:$0xff]
  %v9 = vld [vmem:[%s0 + $0x8] sm:$0xff]
  %10 = vst [vmem:[%s1] sm:$0xff] %v8
  %11 = vst [vmem:[%s1 + $0x8] sm:$0xff] %v9
  // Predicated region
  $region6: #{_int2complex_pallas.1} parent=0 // pred_check
    _
  $region7: #{_int2complex_pallas.1} parent=0 // pred_check_branch
    %13 = sbr.rel (0) target = $region9
  $region8: #{_int2complex_pallas.1} parent=0 // pred_region
    _
  $region9: #{_int2complex_pallas.1} parent=0 // pred_fallthru
    _
  // Predicated region
  $region10: #{_int2complex_pallas.1} parent=0 // pred_check
    _
  $region11: #{_int2complex_pallas.1} parent=0 // pred_check_branch
    %15 = sbr.rel (0) target = $region13
  $region12: #{_int2complex_pallas.1} parent=0 // pred_region
    _
  $region13: #{_int2complex_pallas.1} parent=0 // pred_fallthru
    _

</llo_original>
